<compile_context>
chip_gen: v7x
topology: tpu7x:2x2x1
jax: 0.10.0
libtpu: 0.0.40
codegen_flags: <defaults>
</compile_context>

<pallas_src>
import functools

import jax
import jax.numpy as jnp
from jax import lax
from jax.experimental import pallas as pl
from jax.experimental.pallas import tpu as pltpu


# Padded points get this coordinate; squared distance to any real point is
# ~1e30 (finite, never NaN/overflow, never wins a min against real data).
_PAD_SENTINEL = 1e15


def _round_up(x: int, m: int) -> int:
    return (x + m - 1) // m * m


def _balanced_tile(n: int, granule: int, tile_max: int) -> int:
    """Largest tile <= tile_max (multiple of granule) that balances the tiles."""
    full = _round_up(max(n, 1), granule)
    if full <= tile_max:
        return full
    n_tiles = -(-full // tile_max)            # cdiv
    return _round_up(-(-n // n_tiles), granule)


def _chamfer_kernel(x_ref, y_ref, out_ref, minj_ref, mini_ref, *,
                    nx_valid, ny_valid, tnx, tny, nx_ragged, ny_ragged):
    """One (batch b, Nx-tile, Ny-tile) grid step.

    x_ref:    (1, tnx, D)       gts tile (rows -> sublanes).
    y_ref:    (1, D, tny)       preds tile, transposed (points lane-dense).
    out_ref:  (1, 8, 128)       per-batch loss accumulator (full-vreg stores),
                                resident across the (nx, ny) reduction axes.
    minj_ref: (tnx, 128)        running min over j, lane-folded (loss_2).
    mini_ref: (n_ny, 1, tny)    running min over i per Ny column (loss_1),
                                resident across the nx axis; indexed by ny.
    """
    nx_idx = pl.program_id(1)
    ny_idx = pl.program_id(2)
    last_nx = pl.num_programs(1) - 1
    last_ny = pl.num_programs(2) - 1

    # ---- per-batch init (first grid step of this batch element) -------------
    @pl.when(jnp.logical_and(nx_idx == 0, ny_idx == 0))
    def _():
        mini_ref[...] = jnp.full(mini_ref.shape, jnp.inf, jnp.float32)
        out_ref[...] = jnp.zeros(out_ref.shape, jnp.float32)

    # ---- per (b, nx-tile) init of the running min over Ny -------------------
    @pl.when(ny_idx == 0)
    def _():
        minj_ref[...] = jnp.full(minj_ref.shape, jnp.inf, jnp.float32)

    x = x_ref[0].astype(jnp.float32)          # (tnx, D)  coords on low lanes
    y = y_ref[0].astype(jnp.float32)          # (D, tny)  points lane-dense
    d_dim = x.shape[1]

    # Squared pairwise distances on the VPU (3-term broadcast form; no MXU,
    # no transpose, numerically exact vs. the rx+ry-2zz expansion).
    p = jnp.zeros((tnx, tny), jnp.float32)
    for d in range(d_dim):                                    # D == 3, unrolled
        diff = x[:, d:d + 1] - y[d:d + 1, :]                  # (tnx,1)-(1,tny)
        p = p + diff * diff

    # ---- loss_2 path: running min over j per row i ---------------------------
    # Fold tny lanes -> 128 with elementwise mins over static lane groups
    # (no reshape/relayout), then min into the (tnx, 128) accumulator.
    fold = p[:, 0:128]
    for g in range(1, tny // 128):
        fold = jnp.minimum(fold, p[:, g * 128:(g + 1) * 128])
    minj_ref[...] = jnp.minimum(minj_ref[...], fold)

    # ---- loss_1 path: running min over i per column j ------------------------
    col_min = jnp.min(p, axis=0, keepdims=True)               # (1, tny)
    cur = mini_ref[pl.ds(ny_idx, 1), :, :]                    # (1, 1, tny)
    mini_ref[pl.ds(ny_idx, 1), :, :] = jnp.minimum(cur, col_min[None])

    # ---- per-(b, nx-tile) finalize of loss_2 ---------------------------------
    @pl.when(ny_idx == last_ny)
    def _():
        row_min = jnp.min(minj_ref[...], axis=1, keepdims=True)   # (tnx, 1)
        if nx_ragged:  # static: only emitted when Nx % tnx != 0
            i_glob = nx_idx * tnx + lax.broadcasted_iota(jnp.int32, (tnx, 1), 0)
            row_min = jnp.where(i_glob < nx_valid, row_min, 0.0)
        out_ref[...] += jnp.sum(row_min)

    # ---- per-batch finalize of loss_1 ----------------------------------------
    @pl.when(jnp.logical_and(nx_idx == last_nx, ny_idx == last_ny))
    def _():
        mins = mini_ref[...]                                      # (n_ny, 1, tny)
        if ny_ragged:  # static: only emitted when Ny % tny != 0
            tiles = lax.broadcasted_iota(jnp.int32, mins.shape, 0)
            lanes = lax.broadcasted_iota(jnp.int32, mins.shape, 2)
            mins = jnp.where(tiles * tny + lanes < ny_valid, mins, 0.0)
        out_ref[...] += jnp.sum(mins)


def chamfer_loss(preds: jax.Array, gts: jax.Array, *,
                 tnx_max: int = 512, tny_max: int = 1024) -> jax.Array:
    """Chamfer loss; preds: (B, Ny, D), gts: (B, Nx, D) -> scalar float32."""
    B, Ny, D = preds.shape
    Bx, Nx, Dx = gts.shape
    assert B == Bx and D == Dx

    tny = _balanced_tile(Ny, 128, int(tny_max))
    tnx = _balanced_tile(Nx, 8, int(tnx_max))
    ny_pad = _round_up(Ny, tny)
    nx_pad = _round_up(Nx, tnx)
    n_ny = ny_pad // tny
    n_nx = nx_pad // tnx

    # preds lane-dense: point axis on the 128-lane dimension. Both point axes
    # are padded with a large sentinel so padded pairs never win a min (no
    # per-vreg masking on the hot path).
    y_t = jnp.transpose(preds, (0, 2, 1))                     # (B, D, Ny)
    if ny_pad != Ny:
        y_t = jnp.pad(y_t, ((0, 0), (0, 0), (0, ny_pad - Ny)),
                      constant_values=_PAD_SENTINEL)
    x = gts
    if nx_pad != Nx:
        x = jnp.pad(x, ((0, 0), (0, nx_pad - Nx), (0, 0)),
                    constant_values=_PAD_SENTINEL)

    kernel = functools.partial(
        _chamfer_kernel, nx_valid=Nx, ny_valid=Ny, tnx=tnx, tny=tny,
        nx_ragged=(nx_pad != Nx), ny_ragged=(ny_pad != Ny))

    # Explicit VMEM budget: blocks as they land in VMEM (lane/sublane padded),
    # scratch, plus headroom for compiler temporaries of the (tnx,tny) slab.
    est_bytes = (2 * tnx * 128 * 4        # gts block, double-buffered, lane-padded
                 + 2 * 8 * tny * 4        # preds^T block, double-buffered
                 + 2 * 8 * 128 * 4        # output block
                 + tnx * 128 * 4          # minj scratch
                 + n_ny * 8 * tny * 4     # mini scratch
                 + 6 * tnx * tny * 4)     # distance-slab temporaries
    vmem_limit = int(min(64 * 1024 * 1024, max(int(1.5 * est_bytes),
                                               32 * 1024 * 1024)))

    cost = pl.CostEstimate(
        flops=int(2 * B * nx_pad * ny_pad * (3 * D + 3)),
        transcendentals=0,
        bytes_accessed=int(4 * (B * nx_pad * D * n_ny
                                + B * ny_pad * D * n_nx
                                + B * 8 * 128)))

    out = pl.pallas_call(
        kernel,
        out_shape=jax.ShapeDtypeStruct((B, 8, 128), jnp.float32),
        grid_spec=pltpu.PrefetchScalarGridSpec(
            num_scalar_prefetch=0,
            grid=(B, n_nx, n_ny),
            in_specs=[
                # gts tile: changes with the nx axis only.
                pl.BlockSpec((1, tnx, D), lambda b, i, j: (b, i, 0)),
                # preds^T tile: changes with the ny axis only.
                pl.BlockSpec((1, D, tny), lambda b, i, j: (b, 0, j)),
            ],
            # Per-batch loss block, resident across both reduction axes.
            out_specs=pl.BlockSpec((1, 8, 128), lambda b, i, j: (b, 0, 0)),
            scratch_shapes=[
                pltpu.VMEM((tnx, 128), jnp.float32),      # loss_2 running min
                pltpu.VMEM((n_ny, 1, tny), jnp.float32),  # loss_1 running min
            ],
        ),
        compiler_params=pltpu.CompilerParams(
            # batch axis independent -> megacore parallel on v7x; nx/ny carry
            # the online-min reductions and must stay on one core.
            dimension_semantics=("parallel", "arbitrary", "arbitrary"),
            vmem_limit_bytes=vmem_limit,
        ),
        cost_estimate=cost,
    )(x, y_t)

    # Tiny final reduction over per-batch partials in the wrapper.
    return jnp.sum(out[:, 0, 0])


def chamfer_loss_ref(preds: jax.Array, gts: jax.Array) -> jax.Array:
    """Pure-JAX reference mirroring the PyTorch code (rx + ry - 2*zz form)."""
    x = gts.astype(jnp.float32)
    y = preds.astype(jnp.float32)
    zz = jnp.einsum("bnd,bmd->bnm", x, y)
    rx = jnp.sum(x * x, axis=-1)                              # (B, Nx)
    ry = jnp.sum(y * y, axis=-1)                              # (B, Ny)
    P = rx[:, :, None] + ry[:, None, :] - 2.0 * zz            # (B, Nx, Ny)
    loss_1 = jnp.sum(jnp.min(P, axis=1))
    loss_2 = jnp.sum(jnp.min(P, axis=2))
    return loss_1 + loss_2


if __name__ == "__main__":
    key = jax.random.PRNGKey(0)
    k1, k2, k3, k4 = jax.random.split(key, 4)

    # Small case (single tile per axis).
    B, Nx, Ny, D = 2, 64, 48, 3
    gts = jax.random.normal(k1, (B, Nx, D), dtype=jnp.float32)
    preds = jax.random.normal(k2, (B, Ny, D), dtype=jnp.float32)
    loss = jax.block_until_ready(chamfer_loss(preds, gts))
    ref = jax.block_until_ready(chamfer_loss_ref(preds, gts))
    assert jnp.allclose(loss, ref, rtol=1e-4, atol=1e-3), (loss, ref)

    # Ragged multi-tile case (exercises the nx/ny grid axes and finalize masks).
    B2, Nx2, Ny2 = 2, 200, 300
    gts2 = jax.random.normal(k3, (B2, Nx2, D), dtype=jnp.float32)
    preds2 = jax.random.normal(k4, (B2, Ny2, D), dtype=jnp.float32)
    loss2 = jax.block_until_ready(chamfer_loss(preds2, gts2, tnx_max=64, tny_max=128))
    ref2 = jax.block_until_ready(chamfer_loss_ref(preds2, gts2))
    assert jnp.allclose(loss2, ref2, rtol=1e-4, atol=1e-3), (loss2, ref2)

    print("KERNEL_OK")
</pallas_src>

<mosaic_0001>
module attributes {stable_mosaic.version = 11 : i64} {
  func.func @_chamfer_kernel(%arg0: i32, %arg1: i32, %arg2: i32, %arg3: memref<1x64x3xf32, #tpu.memory_space<vmem>>, %arg4: memref<1x3x128xf32, #tpu.memory_space<vmem>>, %arg5: memref<1x8x128xf32, #tpu.memory_space<vmem>>, %arg6: memref<64x128xf32, #tpu.memory_space<vmem>>, %arg7: memref<1x1x128xf32, #tpu.memory_space<vmem>>) attributes {dimension_semantics = [#tpu.dimension_semantics<parallel>, #tpu.dimension_semantics<arbitrary>, #tpu.dimension_semantics<arbitrary>], iteration_bounds = array<i64: 2, 1, 1>, scalar_prefetch = 0 : i64, scratch_operands = 2 : i64, tpu.core_type = #tpu.core_type<tc>, window_params = [{transform_indices = @transform_0, window_bounds = array<i64: 1, 64, 3>}, {transform_indices = @transform_1, window_bounds = array<i64: 1, 3, 128>}, {transform_indices = @transform_2, window_bounds = array<i64: 1, 8, 128>}]} {
    %c0_i32 = arith.constant 0 : i32
    %0 = arith.cmpi eq, %arg1, %c0_i32 : i32
    %c0_i32_0 = arith.constant 0 : i32
    %1 = arith.cmpi eq, %arg2, %c0_i32_0 : i32
    %2 = arith.andi %0, %1 : i1
    %3 = arith.extui %2 : i1 to i32
    %c0_i32_1 = arith.constant 0 : i32
    %4 = arith.cmpi ne, %3, %c0_i32_1 : i32
    scf.if %4 {
      %cst_23 = arith.constant 0x7F800000 : f32
      %53 = vector.broadcast %cst_23 : f32 to vector<1x1x128xf32>
      %c0_24 = arith.constant 0 : index
      %c0_25 = arith.constant 0 : index
      %c0_26 = arith.constant 0 : index
      %54 = vector.load %arg7[%c0_24, %c0_25, %c0_26] : memref<1x1x128xf32, #tpu.memory_space<vmem>>, vector<1x1x128xf32>
      tpu.vector_store %arg7[%c0_24, %c0_25, %c0_26], %53 {strides = array<i32>} : memref<1x1x128xf32, #tpu.memory_space<vmem>>, vector<1x1x128xf32>,
      %cst_27 = arith.constant 0.000000e+00 : f32
      %55 = vector.broadcast %cst_27 : f32 to vector<1x8x128xf32>
      %c0_28 = arith.constant 0 : index
      %c0_29 = arith.constant 0 : index
      %c0_30 = arith.constant 0 : index
      %56 = vector.load %arg5[%c0_28, %c0_29, %c0_30] : memref<1x8x128xf32, #tpu.memory_space<vmem>>, vector<1x8x128xf32>
      tpu.vector_store %arg5[%c0_28, %c0_29, %c0_30], %55 {strides = array<i32>} : memref<1x8x128xf32, #tpu.memory_space<vmem>>, vector<1x8x128xf32>,
    } else {
    }
    %c0_i32_2 = arith.constant 0 : i32
    %5 = arith.cmpi eq, %arg2, %c0_i32_2 : i32
    %6 = arith.extui %5 : i1 to i32
    %c0_i32_3 = arith.constant 0 : i32
    %7 = arith.cmpi ne, %6, %c0_i32_3 : i32
    scf.if %7 {
      %cst_23 = arith.constant 0x7F800000 : f32
      %53 = vector.broadcast %cst_23 : f32 to vector<64x128xf32>
      %c0_24 = arith.constant 0 : index
      %c0_25 = arith.constant 0 : index
      %54 = vector.load %arg6[%c0_24, %c0_25] : memref<64x128xf32, #tpu.memory_space<vmem>>, vector<64x128xf32>
      tpu.vector_store %arg6[%c0_24, %c0_25], %53 {strides = array<i32>} : memref<64x128xf32, #tpu.memory_space<vmem>>, vector<64x128xf32>,
    } else {
    }
    %c0 = arith.constant 0 : index
    %c0_4 = arith.constant 0 : index
    %c0_5 = arith.constant 0 : index
    %8 = vector.load %arg3[%c0, %c0_4, %c0_5] : memref<1x64x3xf32, #tpu.memory_space<vmem>>, vector<1x64x3xf32>
    %9 = vector.shape_cast %8 : vector<1x64x3xf32> to vector<64x3xf32>
    %c0_6 = arith.constant 0 : index
    %c0_7 = arith.constant 0 : index
    %c0_8 = arith.constant 0 : index
    %10 = vector.load %arg4[%c0_6, %c0_7, %c0_8] : memref<1x3x128xf32, #tpu.memory_space<vmem>>, vector<1x3x128xf32>
    %11 = vector.shape_cast %10 : vector<1x3x128xf32> to vector<3x128xf32>
    %cst = arith.constant 0.000000e+00 : f32
    %12 = vector.broadcast %cst : f32 to vector<64x128xf32>
    %13 = vector.extract_strided_slice %9 {offsets = [0, 0], sizes = [64, 1], strides = [1, 1]} : vector<64x3xf32> to vector<64x1xf32>
    %14 = vector.extract_strided_slice %11 {offsets = [0, 0], sizes = [1, 128], strides = [1, 1]} : vector<3x128xf32> to vector<1x128xf32>
    %15 = vector.broadcast %13 : vector<64x1xf32> to vector<64x128xf32>
    %16 = vector.broadcast %14 : vector<1x128xf32> to vector<64x128xf32>
    %17 = arith.subf %15, %16 : vector<64x128xf32>
    %18 = arith.mulf %17, %17 : vector<64x128xf32>
    %19 = arith.addf %12, %18 : vector<64x128xf32>
    %20 = vector.extract_strided_slice %9 {offsets = [0, 1], sizes = [64, 1], strides = [1, 1]} : vector<64x3xf32> to vector<64x1xf32>
    %21 = vector.extract_strided_slice %11 {offsets = [1, 0], sizes = [1, 128], strides = [1, 1]} : vector<3x128xf32> to vector<1x128xf32>
    %22 = vector.broadcast %20 : vector<64x1xf32> to vector<64x128xf32>
    %23 = vector.broadcast %21 : vector<1x128xf32> to vector<64x128xf32>
    %24 = arith.subf %22, %23 : vector<64x128xf32>
    %25 = arith.mulf %24, %24 : vector<64x128xf32>
    %26 = arith.addf %19, %25 : vector<64x128xf32>
    %27 = vector.extract_strided_slice %9 {offsets = [0, 2], sizes = [64, 1], strides = [1, 1]} : vector<64x3xf32> to vector<64x1xf32>
    %28 = vector.extract_strided_slice %11 {offsets = [2, 0], sizes = [1, 128], strides = [1, 1]} : vector<3x128xf32> to vector<1x128xf32>
    %29 = vector.broadcast %27 : vector<64x1xf32> to vector<64x128xf32>
    %30 = vector.broadcast %28 : vector<1x128xf32> to vector<64x128xf32>
    %31 = arith.subf %29, %30 : vector<64x128xf32>
    %32 = arith.mulf %31, %31 : vector<64x128xf32>
    %33 = arith.addf %26, %32 : vector<64x128xf32>
    %c0_9 = arith.constant 0 : index
    %c0_10 = arith.constant 0 : index
    %34 = vector.load %arg6[%c0_9, %c0_10] : memref<64x128xf32, #tpu.memory_space<vmem>>, vector<64x128xf32>
    %35 = arith.minimumf %34, %33 : vector<64x128xf32>
    %c0_11 = arith.constant 0 : index
    %c0_12 = arith.constant 0 : index
    %36 = vector.load %arg6[%c0_11, %c0_12] : memref<64x128xf32, #tpu.memory_space<vmem>>, vector<64x128xf32>
    tpu.vector_store %arg6[%c0_11, %c0_12], %35 {strides = array<i32>} : memref<64x128xf32, #tpu.memory_space<vmem>>, vector<64x128xf32>,
    %cst_13 = arith.constant dense<0x7F800000> : vector<128xf32>
    %37 = vector.multi_reduction <minimumf>, %33, %cst_13 [0] : vector<64x128xf32> to vector<128xf32>
    %38 = vector.shape_cast %37 : vector<128xf32> to vector<1x128xf32>
    %39 = arith.index_cast %arg2 : i32 to index
    %c0_14 = arith.constant 0 : index
    %c0_15 = arith.constant 0 : index
    %40 = vector.load %arg7[%39, %c0_14, %c0_15] : memref<1x1x128xf32, #tpu.memory_space<vmem>>, vector<1x1x128xf32>
    %41 = vector.shape_cast %38 : vector<1x128xf32> to vector<1x1x128xf32>
    %42 = arith.minimumf %40, %41 : vector<1x1x128xf32>
    %43 = arith.index_cast %arg2 : i32 to index
    %c0_16 = arith.constant 0 : index
    %c0_17 = arith.constant 0 : index
    %44 = vector.load %arg7[%43, %c0_16, %c0_17] : memref<1x1x128xf32, #tpu.memory_space<vmem>>, vector<1x1x128xf32>
    tpu.vector_store %arg7[%43, %c0_16, %c0_17], %42 {strides = array<i32>} : memref<1x1x128xf32, #tpu.memory_space<vmem>>, vector<1x1x128xf32>,
    %c0_i32_18 = arith.constant 0 : i32
    %45 = arith.cmpi eq, %arg2, %c0_i32_18 : i32
    %46 = arith.extui %45 : i1 to i32
    %c0_i32_19 = arith.constant 0 : i32
    %47 = arith.cmpi ne, %46, %c0_i32_19 : i32
    scf.if %47 {
      %c0_23 = arith.constant 0 : index
      %c0_24 = arith.constant 0 : index
      %53 = vector.load %arg6[%c0_23, %c0_24] : memref<64x128xf32, #tpu.memory_space<vmem>>, vector<64x128xf32>
      %cst_25 = arith.constant dense<0x7F800000> : vector<64xf32>
      %54 = vector.multi_reduction <minimumf>, %53, %cst_25 [1] : vector<64x128xf32> to vector<64xf32>
      %55 = vector.shape_cast %54 : vector<64xf32> to vector<64x1xf32>
      %c0_26 = arith.constant 0 : index
      %c0_27 = arith.constant 0 : index
      %c0_28 = arith.constant 0 : index
      %56 = vector.load %arg5[%c0_26, %c0_27, %c0_28] : memref<1x8x128xf32, #tpu.memory_space<vmem>>, vector<1x8x128xf32>
      %57 = vector.shape_cast %55 : vector<64x1xf32> to vector<1x64x1xf32>
      %cst_29 = arith.constant dense<0.000000e+00> : vector<1xf32>
      %58 = vector.multi_reduction <add>, %57, %cst_29 [1, 2] : vector<1x64x1xf32> to vector<1xf32>
      %59 = vector.shape_cast %58 : vector<1xf32> to vector<1x1x1xf32>
      %60 = vector.extract %59[0, 0, 0] : f32 from vector<1x1x1xf32>
      %61 = vector.broadcast %60 : f32 to vector<1x8x128xf32>
      %62 = arith.addf %56, %61 : vector<1x8x128xf32>
      %c0_30 = arith.constant 0 : index
      %c0_31 = arith.constant 0 : index
      %c0_32 = arith.constant 0 : index
      %63 = vector.load %arg5[%c0_30, %c0_31, %c0_32] : memref<1x8x128xf32, #tpu.memory_space<vmem>>, vector<1x8x128xf32>
      tpu.vector_store %arg5[%c0_30, %c0_31, %c0_32], %62 {strides = array<i32>} : memref<1x8x128xf32, #tpu.memory_space<vmem>>, vector<1x8x128xf32>,
    } else {
    }
    %c0_i32_20 = arith.constant 0 : i32
    %48 = arith.cmpi eq, %arg1, %c0_i32_20 : i32
    %c0_i32_21 = arith.constant 0 : i32
    %49 = arith.cmpi eq, %arg2, %c0_i32_21 : i32
    %50 = arith.andi %48, %49 : i1
    %51 = arith.extui %50 : i1 to i32
    %c0_i32_22 = arith.constant 0 : i32
    %52 = arith.cmpi ne, %51, %c0_i32_22 : i32
    scf.if %52 {
      %c0_23 = arith.constant 0 : index
      %c0_24 = arith.constant 0 : index
      %c0_25 = arith.constant 0 : index
      %53 = vector.load %arg7[%c0_23, %c0_24, %c0_25] : memref<1x1x128xf32, #tpu.memory_space<vmem>>, vector<1x1x128xf32>
      %54 = tpu.iota {dimensions = array<i32: 0>} : vector<1x1x128xi32>
      %55 = tpu.iota {dimensions = array<i32: 2>} : vector<1x1x128xi32>
      %c128_i32 = arith.constant 128 : i32
      %56 = vector.broadcast %c128_i32 : i32 to vector<1x1x128xi32>
      %57 = arith.muli %54, %56 : vector<1x1x128xi32>
      %58 = arith.addi %57, %55 : vector<1x1x128xi32>
      %c48_i32 = arith.constant 48 : i32
      %59 = vector.broadcast %c48_i32 : i32 to vector<1x1x128xi32>
      %60 = arith.cmpi slt, %58, %59 : vector<1x1x128xi32>
      %cst_26 = arith.constant 0.000000e+00 : f32
      %61 = vector.broadcast %cst_26 : f32 to vector<1x1x128xf32>
      %62 = arith.select %60, %53, %61 : vector<1x1x128xi1>, vector<1x1x128xf32>
      %c0_27 = arith.constant 0 : index
      %c0_28 = arith.constant 0 : index
      %c0_29 = arith.constant 0 : index
      %63 = vector.load %arg5[%c0_27, %c0_28, %c0_29] : memref<1x8x128xf32, #tpu.memory_space<vmem>>, vector<1x8x128xf32>
      %64 = vector.shape_cast %62 : vector<1x1x128xf32> to vector<1x1x1x128xf32>
      %cst_30 = arith.constant dense<0.000000e+00> : vector<1xf32>
      %65 = vector.multi_reduction <add>, %64, %cst_30 [1, 2, 3] : vector<1x1x1x128xf32> to vector<1xf32>
      %66 = vector.shape_cast %65 : vector<1xf32> to vector<1x1x1x1xf32>
      %67 = vector.extract %66[0, 0, 0, 0] : f32 from vector<1x1x1x1xf32>
      %68 = vector.broadcast %67 : f32 to vector<1x8x128xf32>
      %69 = arith.addf %63, %68 : vector<1x8x128xf32>
      %c0_31 = arith.constant 0 : index
      %c0_32 = arith.constant 0 : index
      %c0_33 = arith.constant 0 : index
      %70 = vector.load %arg5[%c0_31, %c0_32, %c0_33] : memref<1x8x128xf32, #tpu.memory_space<vmem>>, vector<1x8x128xf32>
      tpu.vector_store %arg5[%c0_31, %c0_32, %c0_33], %69 {strides = array<i32>} : memref<1x8x128xf32, #tpu.memory_space<vmem>>, vector<1x8x128xf32>,
    } else {
    }
    return
  }
  func.func @transform_0(%arg0: i32, %arg1: i32, %arg2: i32) -> (i32, i32, i32) {
    %c0_i32 = arith.constant 0 : i32
    %c0_i32_0 = arith.constant 0 : i32
    return %arg0, %arg1, %c0_i32 : i32, i32, i32
  }
  func.func @transform_1(%arg0: i32, %arg1: i32, %arg2: i32) -> (i32, i32, i32) {
    %c0_i32 = arith.constant 0 : i32
    %c0_i32_0 = arith.constant 0 : i32
    return %arg0, %c0_i32, %arg2 : i32, i32, i32
  }
  func.func @transform_2(%arg0: i32, %arg1: i32, %arg2: i32) -> (i32, i32, i32) {
    %c0_i32 = arith.constant 0 : i32
    %c0_i32_0 = arith.constant 0 : i32
    %c0_i32_1 = arith.constant 0 : i32
    return %arg0, %c0_i32, %c0_i32_0 : i32, i32, i32
  }
}

</mosaic_0001>

<llo_original>
// kernel: tpu_custom_call.1
$region0: #{tpu_custom_call.1}
  #allocation0 [shape = 'u32[]', space=smem, size = 0x4, offset = 0x4, fixed_abs, tag = 'smem constant byte address 0x4 - core index']
  #allocation1 [shape = 'u32[144,128]{1,0:T(1,128)}', space=vmem, size = 0x12000, scoped, tag = 'internal scratch']
  #allocation2 [shape = 'f32[64,128]{1,0:T(8,128)}', space=vmem, size = 0x8000, scoped, tag = 'scratch operand']
  #allocation3 [shape = 'f32[1,1,128]{2,1,0:T(1,128)}', space=vmem, size = 0x200, scoped, tag = 'scratch operand']
  %s0 = inlined_call_operand.vmem [shape: f32[2,64,3], index: 0, kind: input, shape index: {}]
  %s1 = inlined_call_operand.vmem [shape: f32[2,3,128], index: 1, kind: input, shape index: {}]
  %s2 = inlined_call_operand.hbm [shape: f32[2,8,128], index: 2, kind: output, shape index: {}]
  %s3 = sld [smem:[#allocation0]]
  $region57: #{tpu_custom_call.1} parent=0
    _
  %s5 = ssub.s32 1, %s3
  %s6 = scalar_select 0, %s5, %s3
  $region1: #{tpu_custom_call.1} parent=0
    #allocation4 [shape = 'u8[8192]{0}', space=vmem, size = 0x2000, scoped, tag = 'output window, operand 0']
    #allocation5 [shape = 's32[2]{0}', space=sflag, size = 0x8, scoped, tag = 'scoped memory for tpu_custom_call.1']
    %7 = vsyncpa [#allocation5], 0
    %s8 = scalar_lea.sflag [#allocation5], 1
    %9 = vsyncpa %s8, 0
    loop: start=0, step=1, limit=4
    $region2: #{tpu_custom_call.1} parent=1 // loop_pre_header
      _
    $region3: #{tpu_custom_call.1} parent=1 // loop_header
      %s11 = sphi 0, %s15
      %p12 = scmp.ge.s32.totalorder %s11, 4
      %s18 = sphi 0, %s37
      %s19 = sphi 0, %s33
      %s20 = sphi 0, %s29
      %s21 = sphi 0, %s18
      %s22 = sphi 0, %s19
      %s23 = sphi 0, %s20
      %s24 = sphi 0, %s21
      %s25 = sphi 0, %s22
      %s26 = sphi 0, %s23
      %s42 = sphi 0, %s44
      %s45 = sphi 0, %s42
      %s46 = sphi 0, %s45
      %s62 = sphi 0, %s46
      %s70 = sphi 0, %s72
      %s73 = sphi 0, %s70
      %s74 = sphi 0, %s73
      %s90 = sphi 0, %s74
      %s96 = sphi 0, %s98
      %s99 = sphi 0, %s96
      %s100 = sphi 0, %s99
      %s116 = sphi 0, %s100
    $region4: #{tpu_custom_call.1} parent=1 // loop_header_branch
      %14 = sbr.rel (%p12) target = $region8
    $region5: #{tpu_custom_call.1} parent=1 // loop_body
      %s16 = ssub.s32 %s11, 1
      %s17 = ssub.s32 %s11, 2
      %s27 = sadd.s32 1, %s20
      %p28 = scmp.ge.s32.totalorder %s27, 1
      %s29 = scalar_select %p28, 0, %s27
      %s30 = sadd.s32 1, %s19
      %s31 = scalar_select %p28, %s30, %s19
      %p32 = scmp.ge.s32.totalorder %s31, 1
      %s33 = scalar_select %p32, 0, %s31
      %s34 = sadd.s32 1, %s18
      %s35 = scalar_select %p32, %s34, %s18
      %p36 = scmp.ge.s32.totalorder %s35, 2
      %s37 = scalar_select %p36, 0, %s35
      %s38 = ssub.s32 %s18, %s37
      %s39 = ssub.s32 %s19, %s33
      %s40 = sor.u32 %s38, %s39
      %p41 = scmp.eq.s32.totalorder %s40, 0
      %s43 = sadd.s32 %s42, 1
      %s44 = scalar_select %p41, %s42, %s43
      %p47 = pneg %p41
      %p48 = scmp.eq.s32.totalorder %s11, 1
      %p49 = por %p47, %p48
      %p50 = scmp.ne.s32.totalorder %s42, %s45
      %p51 = scmp.eq.s32.totalorder %s11, 0
      %p52 = por %p50, %p51
      %p53 = scmp.ne.s32.totalorder %s42, %s45
      %p54 = scmp.eq.s32.totalorder %s16, 1
      %p55 = por %p53, %p54
      %p56 = scmp.ne.s32.totalorder %s45, %s46
      %p57 = scmp.eq.s32.totalorder %s16, 0
      %p58 = por %p56, %p57
      %p59 = scmp.ne.s32.totalorder %s45, %s46
      %p60 = scmp.eq.s32.totalorder %s17, 1
      %p61 = por %p59, %p60
      %p63 = scmp.ne.s32.totalorder %s46, %s62
      %p64 = scmp.eq.s32.totalorder %s17, 0
      %p65 = por %p63, %p64
      %s66 = ssub.s32 %s18, %s37
      %s67 = ssub.s32 %s20, %s29
      %s68 = sor.u32 %s66, %s67
      %p69 = scmp.eq.s32.totalorder %s68, 0
      %s71 = sadd.s32 %s70, 1
      %s72 = scalar_select %p69, %s70, %s71
      %p75 = pneg %p69
      %p76 = scmp.eq.s32.totalorder %s11, 1
      %p77 = por %p75, %p76
      %p78 = scmp.ne.s32.totalorder %s70, %s73
      %p79 = scmp.eq.s32.totalorder %s11, 0
      %p80 = por %p78, %p79
      %p81 = scmp.ne.s32.totalorder %s70, %s73
      %p82 = scmp.eq.s32.totalorder %s16, 1
      %p83 = por %p81, %p82
      %p84 = scmp.ne.s32.totalorder %s73, %s74
      %p85 = scmp.eq.s32.totalorder %s16, 0
      %p86 = por %p84, %p85
      %p87 = scmp.ne.s32.totalorder %s73, %s74
      %p88 = scmp.eq.s32.totalorder %s17, 1
      %p89 = por %p87, %p88
      %p91 = scmp.ne.s32.totalorder %s74, %s90
      %p92 = scmp.eq.s32.totalorder %s17, 0
      %p93 = por %p91, %p92
      %s94 = ssub.s32 %s18, %s37
      %p95 = scmp.eq.s32.totalorder %s94, 0
      %s97 = sadd.s32 %s96, 1
      %s98 = scalar_select %p95, %s96, %s97
      %p101 = pneg %p95
      %p102 = scmp.eq.s32.totalorder %s11, 1
      %p103 = por %p101, %p102
      %p104 = scmp.ne.s32.totalorder %s96, %s99
      %p105 = scmp.eq.s32.totalorder %s11, 0
      %p106 = por %p104, %p105
      %p107 = scmp.ne.s32.totalorder %s96, %s99
      %p108 = scmp.eq.s32.totalorder %s16, 1
      %p109 = por %p107, %p108
      %p110 = scmp.ne.s32.totalorder %s99, %s100
      %p111 = scmp.eq.s32.totalorder %s16, 0
      %p112 = por %p110, %p111
      %p113 = scmp.ne.s32.totalorder %s99, %s100
      %p114 = scmp.eq.s32.totalorder %s17, 1
      %p115 = por %p113, %p114
      %p117 = scmp.ne.s32.totalorder %s100, %s116
      %p118 = scmp.eq.s32.totalorder %s17, 0
      %p119 = por %p117, %p118
      %p120 = scmp.le.s32.totalorder 1, %s11
      %p121 = scmp.lt.s32.totalorder %s11, 3
      %p122 = pnand %p120, %p121
      %p123 = pneg %p122
      // Predicated region
      $region9: #{tpu_custom_call.1} parent=5 // pred_check
        _
      $region10: #{tpu_custom_call.1} parent=5 // pred_check_branch
        %125 = sbr.rel (%p122) target = $region12
      $region11: #{tpu_custom_call.1} parent=5 // pred_region
        %s126 = ssub.s32 %s11, 1
      $region12: #{tpu_custom_call.1} parent=5 // pred_fallthru
        _
      %p127 = scmp.lt.s32.totalorder %s11, 2
      // Predicated region
      $region13: #{tpu_custom_call.1} parent=5 // pred_check
        %p128 = pneg %p127
      $region14: #{tpu_custom_call.1} parent=5 // pred_check_branch
        %130 = sbr.rel (%p128) target = $region16
      $region15: #{tpu_custom_call.1} parent=5 // pred_region
        // Predicated region
        $region17: #{tpu_custom_call.1} parent=15 // pred_check
          %p131 = pneg %p52
        $region18: #{tpu_custom_call.1} parent=15 // pred_check_branch
          %133 = sbr.rel (%p131) target = $region20
        $region19: #{tpu_custom_call.1} parent=15 // pred_region
          %s134 = smul.u32 8, %s19
          %p135 = scmp.lt.s32.totalorder %s18, 1
          %s136 = scalar_select %p135, %s18, 1
          %p137 = scmp.lt.s32.totalorder %s134, 7
          %s138 = scalar_select %p137, %s134, 7
          %s139 = smul.addr %s136, 8
          %s140 = sadd.s32 %s138, %s139
          %s141 = smul.addr %s140, 8
          %s142 = scalar_lea.vmem %s0, %s141
          %s143 = smul.u32 8, %s19
        $region20: #{tpu_custom_call.1} parent=15 // pred_fallthru
          _
        // Predicated region
        $region21: #{tpu_custom_call.1} parent=15 // pred_check
          %p144 = pneg %p80
        $region22: #{tpu_custom_call.1} parent=15 // pred_check_branch
          %146 = sbr.rel (%p144) target = $region24
        $region23: #{tpu_custom_call.1} parent=15 // pred_region
          %p147 = scmp.lt.s32.totalorder %s18, 1
          %s148 = scalar_select %p147, %s18, 1
          %p149 = scmp.lt.s32.totalorder %s20, 0
          %s150 = scalar_select %p149, %s20, 0
          %s151 = sadd.s32 %s150, %s148
          %s152 = smul.addr %s151, 4
          %s153 = scalar_lea.vmem %s1, %s152
        $region24: #{tpu_custom_call.1} parent=15 // pred_fallthru
          _
      $region16: #{tpu_custom_call.1} parent=5 // pred_fallthru
        _
      %p154 = scmp.le.s32.totalorder 1, %s11
      %p155 = scmp.lt.s32.totalorder %s11, 3
      %p156 = pnand %p154, %p155
      %p157 = pneg %p156
      // Predicated region
      $region25: #{tpu_custom_call.1} parent=5 // pred_check
        _
      $region26: #{tpu_custom_call.1} parent=5 // pred_check_branch
        %159 = sbr.rel (%p156) target = $region28
      $region27: #{tpu_custom_call.1} parent=5 // pred_region
        %s160 = ssub.s32 %s11, 1
        %s161 = smul.u32 8, %s22
        %p162 = scmp.lt.s32.totalorder %s21, 1
        %s163 = scalar_select %p162, %s21, 1
        %p164 = scmp.lt.s32.totalorder %s161, 7
        %s165 = scalar_select %p164, %s161, 7
        %s166 = smul.addr %s163, 8
        %s167 = sadd.s32 %s165, %s166
        %s168 = smul.addr %s167, 8
        %s169 = scalar_lea.vmem %s0, %s168
        %p170 = pneg %p58
        %p171 = pneg %p55
        %p172 = scmp.lt.s32.totalorder %s21, 1
        %s173 = scalar_select %p172, %s21, 1
        %p174 = scmp.lt.s32.totalorder %s23, 0
        %s175 = scalar_select %p174, %s23, 0
        %s176 = sadd.s32 %s175, %s173
        %s177 = smul.addr %s176, 4
        %s178 = scalar_lea.vmem %s1, %s177
        %p179 = pneg %p86
        %p180 = pneg %p83
        %p181 = pneg %p112
        %p182 = pneg %p109
        %s183 = sand.u32 %s99, 1
        %s184 = scalar_lea.sflag [#allocation5], %s183
        %s185 = sand.u32 %s99, 1
        %s186 = smul.addr %s185, 8
        %s187 = scalar_lea.vmem [#allocation4], %s186
        %s188 = smul.u32 8, %s22
        %p189 = scmp.lt.s32.totalorder %s21, 1
        %s190 = scalar_select %p189, %s21, 1
        %p191 = scmp.lt.s32.totalorder %s188, 7
        %s192 = scalar_select %p191, %s188, 7
        %s193 = smul.addr %s190, 8
        %s194 = sadd.s32 %s192, %s193
        %s195 = smul.addr %s194, 8
        %s196 = scalar_lea.vmem %s0, %s195
        %s197 = smul.u32 8, %s22
        %p198 = scmp.lt.s32.totalorder %s21, 1
        %s199 = scalar_select %p198, %s21, 1
        %p200 = scmp.lt.s32.totalorder %s23, 0
        %s201 = scalar_select %p200, %s23, 0
        %s202 = sadd.s32 %s201, %s199
        %s203 = smul.addr %s202, 4
        %s204 = scalar_lea.vmem %s1, %s203
        %p205 = scmp.eq.s32.totalorder %s22, 0
        %p206 = scmp.eq.s32.totalorder %s23, 0
        %p207 = pnand %p205, %p206
        %p208 = pneg %p207
        // Predicated region
        $region29: #{tpu_custom_call.1} parent=27 // pred_check
          _
        $region30: #{tpu_custom_call.1} parent=27 // pred_check_branch
          %210 = sbr.rel (%p207) target = $region32
        $region31: #{tpu_custom_call.1} parent=27 // pred_region
          %211 = vst [vmem:[#allocation3] sm:$0x1] inf
          %212 = vst [vmem:[%s187] sm:$0xff] 0.0
        $region32: #{tpu_custom_call.1} parent=27 // pred_fallthru
          _
        // Predicated region
        $region33: #{tpu_custom_call.1} parent=27 // pred_check
          %p213 = pneg %p206
        $region34: #{tpu_custom_call.1} parent=27 // pred_check_branch
          %215 = sbr.rel (%p213) target = $region36
        $region35: #{tpu_custom_call.1} parent=27 // pred_region
          %216 = vst [vmem:[#allocation2] sm:$0xff] inf
          %217 = vst [vmem:[#allocation2 + $0x8] sm:$0xff] inf
          %218 = vst [vmem:[#allocation2 + $0x10] sm:$0xff] inf
          %219 = vst [vmem:[#allocation2 + $0x18] sm:$0xff] inf
          %220 = vst [vmem:[#allocation2 + $0x20] sm:$0xff] inf
          %221 = vst [vmem:[#allocation2 + $0x28] sm:$0xff] inf
          %222 = vst [vmem:[#allocation2 + $0x30] sm:$0xff] inf
          %223 = vst [vmem:[#allocation2 + $0x38] sm:$0xff] inf
        $region36: #{tpu_custom_call.1} parent=27 // pred_fallthru
          _
        %v224 = vld [vmem:[%s196] sm:$0xff]
        %v225 = vld [vmem:[%s196 + $0x8] sm:$0xff]
        %v226 = vld [vmem:[%s196 + $0x10] sm:$0xff]
        %v227 = vld [vmem:[%s196 + $0x18] sm:$0xff]
        %v228 = vld [vmem:[%s196 + $0x20] sm:$0xff]
        %v229 = vld [vmem:[%s196 + $0x28] sm:$0xff]
        %v230 = vld [vmem:[%s196 + $0x30] sm:$0xff]
        %v231 = vld [vmem:[%s196 + $0x38] sm:$0xff]
        %v232 = vld [vmem:[%s204] sm:$0x7]
        %234 = vset.pattern.permute.xlu0 0
        %235 = vperm.xlu0 %234, %v224
        %v236 = vpop.permute.xlu0 %235
        %239 = vset.pattern.permute.xlu0 0
        %240 = vperm.xlu0 %239, %v225
        %v241 = vpop.permute.xlu0 %240
        %244 = vset.pattern.permute.xlu0 0
        %245 = vperm.xlu0 %244, %v226
        %v246 = vpop.permute.xlu0 %245
        %249 = vset.pattern.permute.xlu0 0
        %250 = vperm.xlu0 %249, %v227
        %v251 = vpop.permute.xlu0 %250
        %254 = vset.pattern.permute.xlu0 0
        %255 = vperm.xlu0 %254, %v228
        %v256 = vpop.permute.xlu0 %255
        %259 = vset.pattern.permute.xlu0 0
        %260 = vperm.xlu0 %259, %v229
        %v261 = vpop.permute.xlu0 %260
        %264 = vset.pattern.permute.xlu0 0
        %265 = vperm.xlu0 %264, %v230
        %v266 = vpop.permute.xlu0 %265
        %269 = vset.pattern.permute.xlu0 0
        %270 = vperm.xlu0 %269, %v231
        %v271 = vpop.permute.xlu0 %270
        %v273 = vlaneseq
        %v274 = vshrl.u32 %v273, 7
        %v275 = vsub.s32 0, %v274
        %v276 = vrot.slane %v232, %v275
        %v277 = vsub.f32 %v236, %v276
        %v278 = vsub.f32 %v241, %v276
        %v279 = vsub.f32 %v246, %v276
        %v280 = vsub.f32 %v251, %v276
        %v281 = vsub.f32 %v256, %v276
        %v282 = vsub.f32 %v261, %v276
        %v283 = vsub.f32 %v266, %v276
        %v284 = vsub.f32 %v271, %v276
        %v285 = vmul.f32 %v277, %v277
        %v286 = vmul.f32 %v278, %v278
        %v287 = vmul.f32 %v279, %v279
        %v288 = vmul.f32 %v280, %v280
        %v289 = vmul.f32 %v281, %v281
        %v290 = vmul.f32 %v282, %v282
        %v291 = vmul.f32 %v283, %v283
        %v292 = vmul.f32 %v284, %v284
        %v293 = vadd.f32 %v285, 0.0
        %v294 = vadd.f32 %v286, 0.0
        %v295 = vadd.f32 %v287, 0.0
        %v296 = vadd.f32 %v288, 0.0
        %v297 = vadd.f32 %v289, 0.0
        %v298 = vadd.f32 %v290, 0.0
        %v299 = vadd.f32 %v291, 0.0
        %v300 = vadd.f32 %v292, 0.0
        %301 = vset.pattern.permute.xlu0 1
        %302 = vperm.xlu0 %301, %v224
        %v303 = vpop.permute.xlu0 %302
        %305 = vset.pattern.permute.xlu0 1
        %306 = vperm.xlu0 %305, %v225
        %v307 = vpop.permute.xlu0 %306
        %309 = vset.pattern.permute.xlu0 1
        %310 = vperm.xlu0 %309, %v226
        %v311 = vpop.permute.xlu0 %310
        %313 = vset.pattern.permute.xlu0 1
        %314 = vperm.xlu0 %313, %v227
        %v315 = vpop.permute.xlu0 %314
        %317 = vset.pattern.permute.xlu0 1
        %318 = vperm.xlu0 %317, %v228
        %v319 = vpop.permute.xlu0 %318
        %321 = vset.pattern.permute.xlu0 1
        %322 = vperm.xlu0 %321, %v229
        %v323 = vpop.permute.xlu0 %322
        %325 = vset.pattern.permute.xlu0 1
        %326 = vperm.xlu0 %325, %v230
        %v327 = vpop.permute.xlu0 %326
        %329 = vset.pattern.permute.xlu0 1
        %330 = vperm.xlu0 %329, %v231
        %v331 = vpop.permute.xlu0 %330
        %v333 = vlaneseq
        %v334 = vshrl.u32 %v333, 7
        %v335 = vsub.s32 1, %v334
        %v336 = vrot.slane %v232, %v335
        %v337 = vsub.f32 %v303, %v336
        %v338 = vsub.f32 %v307, %v336
        %v339 = vsub.f32 %v311, %v336
        %v340 = vsub.f32 %v315, %v336
        %v341 = vsub.f32 %v319, %v336
        %v342 = vsub.f32 %v323, %v336
        %v343 = vsub.f32 %v327, %v336
        %v344 = vsub.f32 %v331, %v336
        %v345 = vmul.f32 %v337, %v337
        %v346 = vmul.f32 %v338, %v338
        %v347 = vmul.f32 %v339, %v339
        %v348 = vmul.f32 %v340, %v340
        %v349 = vmul.f32 %v341, %v341
        %v350 = vmul.f32 %v342, %v342
        %v351 = vmul.f32 %v343, %v343
        %v352 = vmul.f32 %v344, %v344
        %v353 = vadd.f32 %v293, %v345
        %v354 = vadd.f32 %v294, %v346
        %v355 = vadd.f32 %v295, %v347
        %v356 = vadd.f32 %v296, %v348
        %v357 = vadd.f32 %v297, %v349
        %v358 = vadd.f32 %v298, %v350
        %v359 = vadd.f32 %v299, %v351
        %v360 = vadd.f32 %v300, %v352
        %361 = vset.pattern.permute.xlu0 2
        %362 = vperm.xlu0 %361, %v224
        %v363 = vpop.permute.xlu0 %362
        %365 = vset.pattern.permute.xlu0 2
        %366 = vperm.xlu0 %365, %v225
        %v367 = vpop.permute.xlu0 %366
        %369 = vset.pattern.permute.xlu0 2
        %370 = vperm.xlu0 %369, %v226
        %v371 = vpop.permute.xlu0 %370
        %373 = vset.pattern.permute.xlu0 2
        %374 = vperm.xlu0 %373, %v227
        %v375 = vpop.permute.xlu0 %374
        %377 = vset.pattern.permute.xlu0 2
        %378 = vperm.xlu0 %377, %v228
        %v379 = vpop.permute.xlu0 %378
        %381 = vset.pattern.permute.xlu0 2
        %382 = vperm.xlu0 %381, %v229
        %v383 = vpop.permute.xlu0 %382
        %385 = vset.pattern.permute.xlu0 2
        %386 = vperm.xlu0 %385, %v230
        %v387 = vpop.permute.xlu0 %386
        %389 = vset.pattern.permute.xlu0 2
        %390 = vperm.xlu0 %389, %v231
        %v391 = vpop.permute.xlu0 %390
        %v393 = vlaneseq
        %v394 = vshrl.u32 %v393, 7
        %v395 = vsub.s32 2, %v394
        %v396 = vrot.slane %v232, %v395
        %v397 = vsub.f32 %v363, %v396
        %v398 = vsub.f32 %v367, %v396
        %v399 = vsub.f32 %v371, %v396
        %v400 = vsub.f32 %v375, %v396
        %v401 = vsub.f32 %v379, %v396
        %v402 = vsub.f32 %v383, %v396
        %v403 = vsub.f32 %v387, %v396
        %v404 = vsub.f32 %v391, %v396
        %v405 = vmul.f32 %v397, %v397
        %v406 = vmul.f32 %v398, %v398
        %v407 = vmul.f32 %v399, %v399
        %v408 = vmul.f32 %v400, %v400
        %v409 = vmul.f32 %v401, %v401
        %v410 = vmul.f32 %v402, %v402
        %v411 = vmul.f32 %v403, %v403
        %v412 = vmul.f32 %v404, %v404
        %v413 = vadd.f32 %v353, %v405
        %v414 = vadd.f32 %v354, %v406
        %v415 = vadd.f32 %v355, %v407
        %v416 = vadd.f32 %v356, %v408
        %v417 = vadd.f32 %v357, %v409
        %v418 = vadd.f32 %v358, %v410
        %v419 = vadd.f32 %v359, %v411
        %v420 = vadd.f32 %v360, %v412
        %v421 = vld [vmem:[#allocation2] sm:$0xff]
        %v422 = vld [vmem:[#allocation2 + $0x8] sm:$0xff]
        %v423 = vld [vmem:[#allocation2 + $0x10] sm:$0xff]
        %v424 = vld [vmem:[#allocation2 + $0x18] sm:$0xff]
        %v425 = vld [vmem:[#allocation2 + $0x20] sm:$0xff]
        %v426 = vld [vmem:[#allocation2 + $0x28] sm:$0xff]
        %v427 = vld [vmem:[#allocation2 + $0x30] sm:$0xff]
        %v428 = vld [vmem:[#allocation2 + $0x38] sm:$0xff]
        %v429 = vmin.f32 %v421, %v413
        %v430 = vmin.f32 %v422, %v414
        %v431 = vmin.f32 %v423, %v415
        %v432 = vmin.f32 %v424, %v416
        %v433 = vmin.f32 %v425, %v417
        %v434 = vmin.f32 %v426, %v418
        %v435 = vmin.f32 %v427, %v419
        %v436 = vmin.f32 %v428, %v420
        %437 = vst [vmem:[#allocation2] sm:$0xff] %v429
        %438 = vst [vmem:[#allocation2 + $0x8] sm:$0xff] %v430
        %439 = vst [vmem:[#allocation2 + $0x10] sm:$0xff] %v431
        %440 = vst [vmem:[#allocation2 + $0x18] sm:$0xff] %v432
        %441 = vst [vmem:[#allocation2 + $0x20] sm:$0xff] %v433
        %442 = vst [vmem:[#allocation2 + $0x28] sm:$0xff] %v434
        %443 = vst [vmem:[#allocation2 + $0x30] sm:$0xff] %v435
        %444 = vst [vmem:[#allocation2 + $0x38] sm:$0xff] %v436
        %v445 = vmin.f32 %v413, %v417
        %v446 = vmin.f32 %v414, %v418
        %v447 = vmin.f32 %v415, %v419
        %v448 = vmin.f32 %v416, %v420
        %v449 = vmin.f32 %v445, %v446
        %v450 = vmin.f32 %v447, %v448
        %v451 = vmin.f32 %v449, %v450
        %v452 = vrot.slane %v451, 4
        %v453 = vmin.f32 %v451, %v452
        %v454 = vrot.slane %v453, 2
        %v455 = vmin.f32 %v453, %v454
        %v456 = vrot.slane %v455, 1
        %v457 = vmin.f32 %v455, %v456
        %s458 = scalar_lea.vmem [#allocation3], %s23
        %v459 = vld [vmem:[%s458] sm:$0x1]
        %v460 = vmin.f32 %v459, %v457
        %461 = vst [vmem:[%s458] sm:$0x1] %v460
        // Predicated region
        $region37: #{tpu_custom_call.1} parent=27 // pred_check
          %p462 = pneg %p206
        $region38: #{tpu_custom_call.1} parent=27 // pred_check_branch
          %464 = sbr.rel (%p462) target = $region40
        $region39: #{tpu_custom_call.1} parent=27 // pred_region
          %v465 = vld [vmem:[#allocation2] sm:$0xff]
          %v466 = vld [vmem:[#allocation2 + $0x8] sm:$0xff]
          %v467 = vld [vmem:[#allocation2 + $0x10] sm:$0xff]
          %v468 = vld [vmem:[#allocation2 + $0x18] sm:$0xff]
          %v469 = vld [vmem:[#allocation2 + $0x20] sm:$0xff]
          %v470 = vld [vmem:[#allocation2 + $0x28] sm:$0xff]
          %v471 = vld [vmem:[#allocation2 + $0x30] sm:$0xff]
          %v472 = vld [vmem:[#allocation2 + $0x38] sm:$0xff]
          %473 = vmin.xlane.f32.xlu0 %v465
          %v474 = vpop.xlane.xlu0 %473
          %475 = vmin.xlane.f32.xlu0 %v466
          %v476 = vpop.xlane.xlu0 %475
          %477 = vmin.xlane.f32.xlu0 %v467
          %v478 = vpop.xlane.xlu0 %477
          %479 = vmin.xlane.f32.xlu0 %v468
          %v480 = vpop.xlane.xlu0 %479
          %481 = vmin.xlane.f32.xlu0 %v469
          %v482 = vpop.xlane.xlu0 %481
          %483 = vmin.xlane.f32.xlu0 %v470
          %v484 = vpop.xlane.xlu0 %483
          %485 = vmin.xlane.f32.xlu0 %v471
          %v486 = vpop.xlane.xlu0 %485
          %487 = vmin.xlane.f32.xlu0 %v472
          %v488 = vpop.xlane.xlu0 %487
          %v489 = vld [vmem:[%s187] sm:$0xff]
          %vm490 = vcmask 7168
          %v491 = vsel %vm490, %v474, 0.0
          %v492 = vsel %vm490, %v476, 0.0
          %v493 = vadd.f32 %v491, %v492
          %v494 = vsel %vm490, %v478, 0.0
          %v495 = vadd.f32 %v493, %v494
          %v496 = vsel %vm490, %v480, 0.0
          %v497 = vadd.f32 %v495, %v496
          %v498 = vsel %vm490, %v482, 0.0
          %v499 = vadd.f32 %v497, %v498
          %v500 = vsel %vm490, %v484, 0.0
          %v501 = vadd.f32 %v499, %v500
          %v502 = vsel %vm490, %v486, 0.0
          %v503 = vadd.f32 %v501, %v502
          %v504 = vsel %vm490, %v488, 0.0
          %v505 = vadd.f32 %v503, %v504
          %506 = vadd.xlane.f32.xlu0 %v505
          %v507 = vpop.xlane.xlu0 %506
          %v508 = vrot.slane %v507, 4
          %v509 = vadd.f32 %v507, %v508
          %v510 = vrot.slane %v509, 2
          %v511 = vadd.f32 %v509, %v510
          %v512 = vrot.slane %v511, 1
          %v513 = vadd.f32 %v511, %v512
          %s514 = vtos %v513
          %v515 = vstv %s514
          %v516 = vadd.f32 %v489, %v515
          %517 = vst [vmem:[%s187] sm:$0xff] %v516
        $region40: #{tpu_custom_call.1} parent=27 // pred_fallthru
          _
        // Predicated region
        $region41: #{tpu_custom_call.1} parent=27 // pred_check
          _
        $region42: #{tpu_custom_call.1} parent=27 // pred_check_branch
          %519 = sbr.rel (%p207) target = $region44
        $region43: #{tpu_custom_call.1} parent=27 // pred_region
          %v520 = vld [vmem:[#allocation3] sm:$0x1]
          %v521 = vlaneseq
          %v522 = vand.u32 %v521, 127
          %vm523 = vcmp.lt.s32.totalorder %v522, 48
          %v524 = vsel %vm523, %v520, 0.0
          %v525 = vld [vmem:[%s187] sm:$0xff]
          %vm526 = vcmask 1040384
          %v527 = vsel %vm526, %v524, 0.0
          %528 = vadd.xlane.f32.xlu0 %v527
          %v529 = vpop.xlane.xlu0 %528
          %v530 = vrot.slane %v529, 4
          %v531 = vadd.f32 %v529, %v530
          %v532 = vrot.slane %v531, 2
          %v533 = vadd.f32 %v531, %v532
          %v534 = vrot.slane %v533, 1
          %v535 = vadd.f32 %v533, %v534
          %s536 = vtos %v535
          %v537 = vstv %s536
          %v538 = vadd.f32 %v525, %v537
          %539 = vst [vmem:[%s187] sm:$0xff] %v538
        $region44: #{tpu_custom_call.1} parent=27 // pred_fallthru
          _
        %s540 = sand.u32 %s99, 1
        %s541 = scalar_lea.sflag [#allocation5], %s540
        %s542 = sand.u32 %s99, 1
        %s543 = smul.addr %s542, 8
        %s544 = scalar_lea.vmem [#allocation4], %s543
        // Predicated region
        $region45: #{tpu_custom_call.1} parent=27 // pred_check
          %p545 = pneg %p109
        $region46: #{tpu_custom_call.1} parent=27 // pred_check_branch
          %547 = sbr.rel (%p545) target = $region48
        $region47: #{tpu_custom_call.1} parent=27 // pred_region
          %s549 = ssub.s32 128, 128
          %550 = vsyncadd %s541, %s549
          %s551 = smul.addr %s21, 128
          %s552 = scalar_lea.hbm %s2, %s551
          %s554 = sshll.u32 %s544, 4
          %s555 = int_to_ptr.vmem [resolvable:$true] %s554
          %557 = dma.vmem_to_hbm [thread:$0]  %s555, 128, %s552, %s541
        $region48: #{tpu_custom_call.1} parent=27 // pred_fallthru
          _
      $region28: #{tpu_custom_call.1} parent=5 // pred_fallthru
        _
      %p558 = scmp.le.s32.totalorder 2, %s11
      // Predicated region
      $region49: #{tpu_custom_call.1} parent=5 // pred_check
        %p559 = pneg %p558
      $region50: #{tpu_custom_call.1} parent=5 // pred_check_branch
        %561 = sbr.rel (%p559) target = $region52
      $region51: #{tpu_custom_call.1} parent=5 // pred_region
        %s562 = ssub.s32 %s11, 2
        // Predicated region
        $region53: #{tpu_custom_call.1} parent=51 // pred_check
          %p563 = pneg %p115
        $region54: #{tpu_custom_call.1} parent=51 // pred_check_branch
          %565 = sbr.rel (%p563) target = $region56
        $region55: #{tpu_custom_call.1} parent=51 // pred_region
          %s566 = sand.u32 %s100, 1
          %s567 = scalar_lea.sflag [#allocation5], %s566
          %s568 = sand.u32 %s100, 1
          %s569 = smul.addr %s568, 8
          %s570 = scalar_lea.vmem [#allocation4], %s569
          %571 = dma.done %s567, 128
        $region56: #{tpu_custom_call.1} parent=51 // pred_fallthru
          _
      $region52: #{tpu_custom_call.1} parent=5 // pred_fallthru
        _
    $region6: #{tpu_custom_call.1} parent=1 // loop_footer
      %s15 = sadd.s32 1, %s11
    $region7: #{tpu_custom_call.1} parent=1 // loop_footer_branch
      %10 = sbr.rel target = $region3
    $region8: #{tpu_custom_call.1} parent=1 // loop_exit
      _
    %572 = vsyncpa [#allocation5], 1
    %s573 = scalar_lea.sflag [#allocation5], 1
    %574 = vsyncpa %s573, 1

</llo_original>
